<compile_context>
chip_gen: v7x
topology: tpu7x:2x2x1
jax: 0.10.0
libtpu: 0.0.40
codegen_flags: <defaults>
</compile_context>

<pallas_src>
import jax
import jax.numpy as jnp
from jax.experimental import pallas as pl
from jax.experimental.pallas import tpu as pltpu

HIDDEN_DIM = 32          # transformer.hidden_dim (divisible by 32 -> GroupNorm groups of 1 channel)
NUM_QUERIES = 8
NUM_FEATURE_MAPS = 2
GN_EPS = 1e-5

# ---- heads: column layout of the concatenated first matmul (input side) ----
_C_THIS_H = 0      # 32 cols (this_edge MLP layer 1)
_C_P1 = 32         # 32 cols (point MLP layer 1)
_C_EDGE = 64       # 17 cols
_C_LAST = 81       # 17 cols
_C_SEM = 98        # 52 cols (4 semantic heads x 13)
_WCAT_COLS = 150

# ---- heads: column layout of the packed, lane-dense (N, 128) output --------
_O_THIS = 0        # [0, 17)
_O_COORD = 17      # [17, 19)
_O_EDGE = 19       # [19, 36)
_O_LAST = 36       # [36, 53)
_O_SEM = 53        # [53, 105)  lu | ru | rd | ld
_O_USED = 105
_OUT_W = 128       # padded up to a lane-dense multiple of 128


def anumber_func(hidden_dim):
    # TODO(synk): `anumber_func` is not defined in the reference source; return -1 so
    # every feature level takes the Conv1x1 + GroupNorm projection branch.
    return -1


# ---------------------------------------------------------------------------
# Pallas kernel 1: fused 1x1 conv (channel matmul) + GroupNorm for ALL feature
# levels, one sample per grid step (grid over batch, "parallel" for v7x).
# Layout is transposed: x is (Cin, sum_l HW_l) per sample so the spatial dim
# sits on lanes; y^T = W^T @ x^T gives lane-dense (Cout, HW) outputs and the
# GroupNorm reduction is a cross-lane (XLU) reduce.
# GroupNorm(32, hidden_dim=32) => group size 1 => per-channel normalization
# over the spatial extent of each sample/level.
# TODO(synk): if hidden_dim changes so groups hold >1 channel, the reduction
# must also span channels within a group (not done here).
# TODO(synk): padding mask is not applied to the GroupNorm statistics (matches
# the reference only when masks are trivial).
# ---------------------------------------------------------------------------
def make_input_proj_gn_kernel(level_hw):
    def kernel(x_ref, wT_ref, prm_ref, o_ref):
        # x_ref: (Cin_max, TOT)   o_ref: (Cout, TOT)
        # wT_ref: (L, Cout, Cin_max)   prm_ref: (L, Cout, 3) = bias|gamma|beta
        off = 0
        for l, hw in enumerate(level_hw):          # unrolled at trace time
            x_l = x_ref[:, off:off + hw]                                   # (Cin_max, hw)
            b = prm_ref[l, :, 0:1]                                         # (Cout, 1)
            g = prm_ref[l, :, 1:2]
            be = prm_ref[l, :, 2:3]
            y = jnp.dot(wT_ref[l], x_l,
                        preferred_element_type=jnp.float32) + b            # (Cout, hw)
            inv_hw = 1.0 / float(hw)
            mean = jnp.sum(y, axis=1, keepdims=True) * inv_hw              # (Cout, 1)
            ex2 = jnp.sum(y * y, axis=1, keepdims=True) * inv_hw
            var = jnp.maximum(ex2 - mean * mean, 0.0)
            scale = g * jax.lax.rsqrt(var + GN_EPS)                        # fold gamma
            shift = be - mean * scale                                      # fold beta + mean
            o_ref[:, off:off + hw] = y * scale + shift
            off += hw
    return kernel


def pack_input_proj_inputs(feats_nchw):
    """Pack per-level NCHW features into one (B, Cin_max, sum_l HW_l) slab."""
    B = feats_nchw[0].shape[0]
    cin_max = max(f.shape[1] for f in feats_nchw)
    cols, level_hw = [], []
    for f in feats_nchw:
        _, c, h, w = f.shape
        hw = h * w
        level_hw.append(hw)
        xf = f.reshape(B, c, hw)
        if c < cin_max:
            xf = jnp.pad(xf, ((0, 0), (0, cin_max - c), (0, 0)))
        cols.append(xf)
    return jnp.concatenate(cols, axis=2), level_hw, cin_max


def pack_input_proj_params(input_proj, cin_max):
    """Stack per-level weights into a transposed slab and pack b/gamma/beta."""
    wT_l, prm_l = [], []
    for (w, b, gamma, beta) in input_proj:        # w: (Cin_l, Cout), rest: (1, Cout)
        wT = w.T                                  # (Cout, Cin_l)
        if wT.shape[1] < cin_max:
            wT = jnp.pad(wT, ((0, 0), (0, cin_max - wT.shape[1])))
        wT_l.append(wT)
        prm_l.append(jnp.concatenate([b.T, gamma.T, beta.T], axis=1))   # (Cout, 3)
    return jnp.stack(wT_l), jnp.stack(prm_l)


def input_proj_fused(x_packed, wT_slab, prm_slab, level_hw):
    B, cin_max, TOT = x_packed.shape
    L, Cout, _ = wT_slab.shape
    return pl.pallas_call(
        make_input_proj_gn_kernel(level_hw),
        out_shape=jax.ShapeDtypeStruct((B, Cout, TOT), jnp.float32),
        grid=(B,),
        in_specs=[
            pl.BlockSpec((None, cin_max, TOT), lambda b: (b, 0, 0)),
            pl.BlockSpec((L, Cout, cin_max), lambda b: (0, 0, 0)),
            pl.BlockSpec((L, Cout, 3), lambda b: (0, 0, 0)),
        ],
        out_specs=pl.BlockSpec((None, Cout, TOT), lambda b: (b, 0, 0)),
        compiler_params=pltpu.CompilerParams(dimension_semantics=("parallel",)),
    )(x_packed, wT_slab, prm_slab)


# ---------------------------------------------------------------------------
# Pallas kernel 2: all prediction heads fused, single invocation.
#   matmul 1: x @ W_cat (32 -> 150) = this_h | p_h | edge | last | 4x semantic
#   matmul 2: relu([this_h|p_h]) @ block-diag (64 -> 49) = p2 | this
#   matmuls 3/4: point L3/L4, then += reference, sigmoid.
#   Everything lands in one packed lane-dense (N, 128) output.
# ---------------------------------------------------------------------------
def _heads_kernel(x_ref, ref_ref, wcat_ref, bcat_ref,
                  w2_ref, b2_ref, wp3_ref, bp3_ref, wp4_ref, bp4_ref,
                  o_ref):
    x = x_ref[...]                                                   # (N, 32) bf16
    # single wide MXU matmul (bf16 in, f32 accumulate)
    y0 = jnp.dot(x, wcat_ref[...],
                 preferred_element_type=jnp.float32) + bcat_ref[...]  # (N, 150) f32

    # fused this_edge-L2 + point-L2 (block-diagonal weights, one matmul)
    h = jnp.maximum(y0[:, 0:2 * HIDDEN_DIM], 0.0)                    # (N, 64) aligned slice
    z = jnp.dot(h, w2_ref[...],
                preferred_element_type=jnp.float32) + b2_ref[...]     # (N, 49) = p2 | this
    this = z[:, HIDDEN_DIM:HIDDEN_DIM + 17]                           # (N, 17)

    # point: remaining layers, += reference, sigmoid
    p = jnp.maximum(z[:, 0:HIDDEN_DIM], 0.0)
    p = jnp.maximum(jnp.dot(p, wp3_ref[...],
                            preferred_element_type=jnp.float32) + bp3_ref[...], 0.0)
    p = jnp.dot(p, wp4_ref[...],
                preferred_element_type=jnp.float32) + bp4_ref[...]    # (N, 2)
    coord = jax.nn.sigmoid(p + ref_ref[...])

    n = o_ref.shape[0]
    o_ref[:, _O_THIS:_O_THIS + 17] = this
    o_ref[:, _O_COORD:_O_COORD + 2] = coord
    # edge | last_edge | 4x semantic pass through in ONE contiguous 86-col store
    o_ref[:, _O_EDGE:_O_EDGE + 86] = y0[:, _C_EDGE:_C_EDGE + 86]
    o_ref[:, _O_USED:_OUT_W] = jnp.zeros((n, _OUT_W - _O_USED), jnp.float32)


def pack_head_params(params):
    we, be_ = params['edge_embed']
    wl, bl = params['last_edge_embed']
    (wt1, bt1), (wt2, bt2) = params['this_edge_embed']
    (wp1, bp1), (wp2, bp2), (wp3, bp3), (wp4, bp4) = params['point_embed']
    wlu, blu = params['semantic_left_up']
    wru, bru = params['semantic_right_up']
    wrd, brd = params['semantic_right_down']
    wld, bld = params['semantic_left_down']

    # wide first matmul: [this_h | p_h | edge | last | sem lu|ru|rd|ld]
    w_cat = jnp.concatenate([wt1, wp1, we, wl, wlu, wru, wrd, wld], axis=1)   # (32, 150)
    b_cat = jnp.concatenate([bt1, bp1, be_, bl, blu, bru, brd, bld], axis=1)  # (1, 150)

    # block-diagonal second matmul: rows = [this_h | p_h], cols = [p2 | this]
    H = HIDDEN_DIM
    w2 = jnp.zeros((2 * H, H + 17), jnp.float32)
    w2 = w2.at[H:, :H].set(wp2)     # p_h  rows -> point-L2 cols
    w2 = w2.at[:H, H:].set(wt2)     # this rows -> this_edge-L2 cols
    b2 = jnp.concatenate([bp2, bt2], axis=1)                                 # (1, 49)

    return dict(w_cat=w_cat.astype(jnp.bfloat16), b_cat=b_cat,
                w2=w2, b2=b2, wp3=wp3, bp3=bp3, wp4=wp4, bp4=bp4)


def heads_pallas(x_bf16, ref_flat, hp):
    N = x_bf16.shape[0]
    return pl.pallas_call(
        _heads_kernel,
        out_shape=jax.ShapeDtypeStruct((N, _OUT_W), jnp.float32),
    )(x_bf16, ref_flat, hp['w_cat'], hp['b_cat'],
      hp['w2'], hp['b2'], hp['wp3'], hp['bp3'], hp['wp4'], hp['bp4'])


# ---------------------------------------------------------------------------
# Deterministic stand-ins for the externally-provided submodules (plain JAX).
# ---------------------------------------------------------------------------
def _sine_pos(B, H, W, hidden):
    yy = jax.lax.broadcasted_iota(jnp.float32, (H, W), 0) / float(H)
    xx = jax.lax.broadcasted_iota(jnp.float32, (H, W), 1) / float(W)
    freqs = jnp.arange(hidden, dtype=jnp.float32) + 1.0
    pos = jnp.sin(yy[..., None] * freqs) + jnp.cos(xx[..., None] * freqs)   # (H, W, hidden)
    pos = jnp.transpose(pos, (2, 0, 1))                                     # (C, H, W)
    return jnp.broadcast_to(pos[None], (B, hidden, H, W))


def synthetic_backbone_with_pos(samples, num_channels, hidden_dim):
    """Stand-in for backbone_with_position_embedding(NestedTensor)."""
    x, _pad_mask = samples            # x: NCHW
    B = x.shape[0]
    features, pos = [], []
    cur = x
    for l, ch in enumerate(num_channels):
        if l > 0:
            Hc, Wc = cur.shape[2] // 2, cur.shape[3] // 2
            cur = cur.reshape(B, cur.shape[1], Hc, 2, Wc, 2).mean(axis=(3, 5))
        reps = -(-ch // cur.shape[1])
        feat = jnp.tile(cur, (1, reps, 1, 1))[:, :ch]                       # NCHW
        Hl, Wl = feat.shape[2], feat.shape[3]
        mask = jnp.zeros((B, Hl, Wl), dtype=bool)
        features.append((feat, mask))
        pos.append(_sine_pos(B, Hl, Wl, hidden_dim))
    return features, pos


def synthetic_transformer(srcs_flat, masks, pos_flat, query_embeds, params):
    """Stand-in for the deformable transformer: returns (outputs, reference_points)."""
    B = srcs_flat[0].shape[0]
    memory = jnp.concatenate([s + p for s, p in zip(srcs_flat, pos_flat)], axis=1)
    mem_mean = memory.mean(axis=1)                                          # (B, hidden)
    tgt, qpos = jnp.split(query_embeds, 2, axis=1)                          # (Q, hidden) each
    outputs = jnp.tanh(tgt[None] + qpos[None] + mem_mean[:, None, :])       # (B, Q, hidden)
    w_ref, b_ref = params['ref_point_linear']
    reference_points = jax.nn.sigmoid(qpos @ w_ref + b_ref)                 # (Q, 2)
    reference_points = jnp.broadcast_to(reference_points[None], (B,) + reference_points.shape)
    return outputs, reference_points


def inverse_sigmoid(x, eps=1e-5):
    x = jnp.clip(x, 0.0, 1.0)
    x1 = jnp.maximum(x, eps)
    x2 = jnp.maximum(1.0 - x, eps)
    return jnp.log(x1 / x2)


# ---------------------------------------------------------------------------
# Full forward pass (mirrors DeformableDETR.forward).
# ---------------------------------------------------------------------------
def deformable_detr_forward(params, samples):
    features, pos = synthetic_backbone_with_pos(samples, params['num_channels'], HIDDEN_DIM)
    feats_nchw = [f for f, _m in features]
    masks = [m for _f, m in features]

    # (anumber_func() == -1, so every level uses Conv1x1 + GroupNorm.)
    # Fused: all levels + all samples in ONE pallas_call.
    x_packed, level_hw, cin_max = pack_input_proj_inputs(feats_nchw)
    wT_slab, prm_slab = pack_input_proj_params(params['input_proj'], cin_max)
    proj = input_proj_fused(x_packed, wT_slab, prm_slab, level_hw)          # (B, C, TOT)

    srcs_flat, off = [], 0
    for hw in level_hw:
        srcs_flat.append(jnp.transpose(proj[:, :, off:off + hw], (0, 2, 1)))       # (B, HW_l, C)
        off += hw
    pos_flat = [jnp.transpose(p.reshape(p.shape[0], p.shape[1], -1), (0, 2, 1)) for p in pos]

    query_embeds = params['query_embed']
    outputs, reference_points = synthetic_transformer(srcs_flat, masks, pos_flat,
                                                      query_embeds, params)
    reference = inverse_sigmoid(reference_points)

    B, Q, Hd = outputs.shape
    x_flat = outputs.reshape(B * Q, Hd).astype(jnp.bfloat16)   # bf16 for the MXU matmul
    ref_flat = reference.reshape(B * Q, 2)

    packed = heads_pallas(x_flat, ref_flat, pack_head_params(params))   # (B*Q, 128)

    def col(a, n):
        return packed[:, a:a + n].reshape(B, Q, n)

    return {
        'pred_points': col(_O_COORD, 2),
        'pred_edges': col(_O_EDGE, 17),
        'pred_last_edges': col(_O_LAST, 17),
        'pred_this_edges': col(_O_THIS, 17),
        'pred_semantic_left_up': col(_O_SEM, 13),
        'pred_semantic_right_up': col(_O_SEM + 13, 13),
        'pred_semantic_right_down': col(_O_SEM + 26, 13),
        'pred_semantic_left_down': col(_O_SEM + 39, 13),
    }


# ---------------------------------------------------------------------------
# Deterministic parameter initialization (shapes follow the module __init__).
# ---------------------------------------------------------------------------
def init_params(key):
    keys = iter(jax.random.split(key, 32))

    def linear(k, fin, fout, scale=0.1):
        kw, kb = jax.random.split(k)
        w = scale * jax.random.normal(kw, (fin, fout), jnp.float32)   # (in, out) = PyTorch W^T
        b = scale * jax.random.normal(kb, (1, fout), jnp.float32)
        return w, b

    params = {'num_channels': [4, 4]}   # backbone_with_position_embedding.num_channels

    input_proj = []
    for l in range(NUM_FEATURE_MAPS):
        w, b = linear(next(keys), params['num_channels'][l], HIDDEN_DIM)
        gamma = jnp.ones((1, HIDDEN_DIM), jnp.float32)
        beta = jnp.zeros((1, HIDDEN_DIM), jnp.float32)
        input_proj.append((w, b, gamma, beta))
    params['input_proj'] = input_proj

    params['query_embed'] = 0.1 * jax.random.normal(
        next(keys), (NUM_QUERIES, 2 * HIDDEN_DIM), jnp.float32)

    params['edge_embed'] = linear(next(keys), HIDDEN_DIM, 17)
    params['last_edge_embed'] = linear(next(keys), HIDDEN_DIM, 17)
    params['this_edge_embed'] = [linear(next(keys), HIDDEN_DIM, HIDDEN_DIM),
                                 linear(next(keys), HIDDEN_DIM, 17)]
    params['point_embed'] = [linear(next(keys), HIDDEN_DIM, HIDDEN_DIM),
                             linear(next(keys), HIDDEN_DIM, HIDDEN_DIM),
                             linear(next(keys), HIDDEN_DIM, HIDDEN_DIM),
                             linear(next(keys), HIDDEN_DIM, 2)]
    params['semantic_left_up'] = linear(next(keys), HIDDEN_DIM, 13)
    params['semantic_right_up'] = linear(next(keys), HIDDEN_DIM, 13)
    params['semantic_right_down'] = linear(next(keys), HIDDEN_DIM, 13)
    params['semantic_left_down'] = linear(next(keys), HIDDEN_DIM, 13)
    params['ref_point_linear'] = linear(next(keys), HIDDEN_DIM, 2)   # transformer stand-in
    return params


if __name__ == "__main__":
    key = jax.random.PRNGKey(0)
    pkey, xkey = jax.random.split(key)
    params = init_params(pkey)

    x = jax.random.normal(xkey, (2, 4, 16, 16), jnp.float32)   # NCHW samples
    pad_mask = jnp.zeros((2, 16, 16), dtype=bool)

    out = deformable_detr_forward(params, (x, pad_mask))
    jax.block_until_ready(out)

    assert out['pred_points'].shape == (2, NUM_QUERIES, 2)
    assert out['pred_edges'].shape == (2, NUM_QUERIES, 17)
    assert out['pred_last_edges'].shape == (2, NUM_QUERIES, 17)
    assert out['pred_this_edges'].shape == (2, NUM_QUERIES, 17)
    assert out['pred_semantic_left_up'].shape == (2, NUM_QUERIES, 13)
    assert out['pred_semantic_right_up'].shape == (2, NUM_QUERIES, 13)
    assert out['pred_semantic_right_down'].shape == (2, NUM_QUERIES, 13)
    assert out['pred_semantic_left_down'].shape == (2, NUM_QUERIES, 13)
    assert bool(jnp.all((out['pred_points'] >= 0.0) & (out['pred_points'] <= 1.0)))

    print("KERNEL_OK")
</pallas_src>

<mosaic_0001>
module attributes {stable_mosaic.version = 11 : i64} {
  func.func @kernel(%arg0: i32, %arg1: memref<1x4x320xf32, #tpu.memory_space<vmem>>, %arg2: memref<2x32x4xf32, #tpu.memory_space<vmem>>, %arg3: memref<2x32x3xf32, #tpu.memory_space<vmem>>, %arg4: memref<1x32x320xf32, #tpu.memory_space<vmem>>) attributes {dimension_semantics = [#tpu.dimension_semantics<parallel>], iteration_bounds = array<i64: 2>, scalar_prefetch = 0 : i64, scratch_operands = 0 : i64, tpu.core_type = #tpu.core_type<tc>, window_params = [{transform_indices = @transform_0, window_bounds = array<i64: 1, 4, 320>}, {pipeline_mode = #tpu.pipeline_mode<synchronous>, transform_indices = @transform_1, window_bounds = array<i64: 2, 32, 4>}, {pipeline_mode = #tpu.pipeline_mode<synchronous>, transform_indices = @transform_2, window_bounds = array<i64: 2, 32, 3>}, {transform_indices = @transform_3, window_bounds = array<i64: 1, 32, 320>}]} {
    %c0 = arith.constant 0 : index
    %c0_0 = arith.constant 0 : index
    %c0_1 = arith.constant 0 : index
    %0 = vector.load %arg1[%c0, %c0_0, %c0_1] : memref<1x4x320xf32, #tpu.memory_space<vmem>>, vector<1x4x256xf32>
    %1 = vector.shape_cast %0 : vector<1x4x256xf32> to vector<4x256xf32>
    %c0_2 = arith.constant 0 : index
    %c0_3 = arith.constant 0 : index
    %c0_4 = arith.constant 0 : index
    %2 = vector.load %arg3[%c0_2, %c0_3, %c0_4] : memref<2x32x3xf32, #tpu.memory_space<vmem>>, vector<1x32x1xf32>
    %3 = vector.shape_cast %2 : vector<1x32x1xf32> to vector<32x1xf32>
    %c0_5 = arith.constant 0 : index
    %c0_6 = arith.constant 0 : index
    %c1 = arith.constant 1 : index
    %4 = vector.load %arg3[%c0_5, %c0_6, %c1] : memref<2x32x3xf32, #tpu.memory_space<vmem>>, vector<1x32x1xf32>
    %5 = vector.shape_cast %4 : vector<1x32x1xf32> to vector<32x1xf32>
    %c0_7 = arith.constant 0 : index
    %c0_8 = arith.constant 0 : index
    %c2 = arith.constant 2 : index
    %6 = vector.load %arg3[%c0_7, %c0_8, %c2] : memref<2x32x3xf32, #tpu.memory_space<vmem>>, vector<1x32x1xf32>
    %7 = vector.shape_cast %6 : vector<1x32x1xf32> to vector<32x1xf32>
    %c0_9 = arith.constant 0 : index
    %c0_10 = arith.constant 0 : index
    %c0_11 = arith.constant 0 : index
    %8 = vector.load %arg2[%c0_9, %c0_10, %c0_11] : memref<2x32x4xf32, #tpu.memory_space<vmem>>, vector<1x32x4xf32>
    %9 = vector.shape_cast %8 : vector<1x32x4xf32> to vector<32x4xf32>
    %cst = arith.constant dense<0.000000e+00> : vector<32x256xf32>
    %10 = tpu.matmul %9, %1, %cst {dimension_numbers = #tpu.dot_dimension_numbers<[1], [0], [0], [1], [0, 0, 1, 1], [], []>} : vector<32x4xf32>, vector<4x256xf32>, vector<32x256xf32> -> vector<32x256xf32>
    %11 = vector.broadcast %3 : vector<32x1xf32> to vector<32x256xf32>
    %12 = arith.addf %10, %11 : vector<32x256xf32>
    %cst_12 = arith.constant dense<0.000000e+00> : vector<32xf32>
    %13 = vector.multi_reduction <add>, %12, %cst_12 [1] : vector<32x256xf32> to vector<32xf32>
    %14 = vector.shape_cast %13 : vector<32xf32> to vector<32x1xf32>
    %cst_13 = arith.constant 3.906250e-03 : f32
    %15 = vector.broadcast %cst_13 : f32 to vector<32x1xf32>
    %16 = arith.mulf %14, %15 : vector<32x1xf32>
    %17 = arith.mulf %12, %12 : vector<32x256xf32>
    %cst_14 = arith.constant dense<0.000000e+00> : vector<32xf32>
    %18 = vector.multi_reduction <add>, %17, %cst_14 [1] : vector<32x256xf32> to vector<32xf32>
    %19 = vector.shape_cast %18 : vector<32xf32> to vector<32x1xf32>
    %cst_15 = arith.constant 3.906250e-03 : f32
    %20 = vector.broadcast %cst_15 : f32 to vector<32x1xf32>
    %21 = arith.mulf %19, %20 : vector<32x1xf32>
    %22 = arith.mulf %16, %16 : vector<32x1xf32>
    %23 = arith.subf %21, %22 : vector<32x1xf32>
    %cst_16 = arith.constant 0.000000e+00 : f32
    %24 = vector.broadcast %cst_16 : f32 to vector<32x1xf32>
    %25 = arith.maximumf %23, %24 : vector<32x1xf32>
    %cst_17 = arith.constant 9.99999974E-6 : f32
    %26 = vector.broadcast %cst_17 : f32 to vector<32x1xf32>
    %27 = arith.addf %25, %26 : vector<32x1xf32>
    %28 = math.rsqrt %27 : vector<32x1xf32>
    %29 = arith.mulf %5, %28 : vector<32x1xf32>
    %30 = arith.mulf %16, %29 : vector<32x1xf32>
    %31 = arith.subf %7, %30 : vector<32x1xf32>
    %32 = vector.broadcast %29 : vector<32x1xf32> to vector<32x256xf32>
    %33 = arith.mulf %12, %32 : vector<32x256xf32>
    %34 = vector.broadcast %31 : vector<32x1xf32> to vector<32x256xf32>
    %35 = arith.addf %33, %34 : vector<32x256xf32>
    %c0_18 = arith.constant 0 : index
    %c0_19 = arith.constant 0 : index
    %c0_20 = arith.constant 0 : index
    %36 = vector.load %arg4[%c0_18, %c0_19, %c0_20] : memref<1x32x320xf32, #tpu.memory_space<vmem>>, vector<1x32x256xf32>
    %37 = vector.shape_cast %36 : vector<1x32x256xf32> to vector<32x256xf32>
    %38 = vector.shape_cast %35 : vector<32x256xf32> to vector<1x32x256xf32>
    tpu.vector_store %arg4[%c0_18, %c0_19, %c0_20], %38 {strides = array<i32>} : memref<1x32x320xf32, #tpu.memory_space<vmem>>, vector<1x32x256xf32>,
    %c0_21 = arith.constant 0 : index
    %c0_22 = arith.constant 0 : index
    %c256 = arith.constant 256 : index
    %39 = vector.load %arg1[%c0_21, %c0_22, %c256] : memref<1x4x320xf32, #tpu.memory_space<vmem>>, vector<1x4x64xf32>
    %40 = vector.shape_cast %39 : vector<1x4x64xf32> to vector<4x64xf32>
    %c1_23 = arith.constant 1 : index
    %c0_24 = arith.constant 0 : index
    %c0_25 = arith.constant 0 : index
    %41 = vector.load %arg3[%c1_23, %c0_24, %c0_25] : memref<2x32x3xf32, #tpu.memory_space<vmem>>, vector<1x32x1xf32>
    %42 = vector.shape_cast %41 : vector<1x32x1xf32> to vector<32x1xf32>
    %c1_26 = arith.constant 1 : index
    %c0_27 = arith.constant 0 : index
    %c1_28 = arith.constant 1 : index
    %43 = vector.load %arg3[%c1_26, %c0_27, %c1_28] : memref<2x32x3xf32, #tpu.memory_space<vmem>>, vector<1x32x1xf32>
    %44 = vector.shape_cast %43 : vector<1x32x1xf32> to vector<32x1xf32>
    %c1_29 = arith.constant 1 : index
    %c0_30 = arith.constant 0 : index
    %c2_31 = arith.constant 2 : index
    %45 = vector.load %arg3[%c1_29, %c0_30, %c2_31] : memref<2x32x3xf32, #tpu.memory_space<vmem>>, vector<1x32x1xf32>
    %46 = vector.shape_cast %45 : vector<1x32x1xf32> to vector<32x1xf32>
    %c1_32 = arith.constant 1 : index
    %c0_33 = arith.constant 0 : index
    %c0_34 = arith.constant 0 : index
    %47 = vector.load %arg2[%c1_32, %c0_33, %c0_34] : memref<2x32x4xf32, #tpu.memory_space<vmem>>, vector<1x32x4xf32>
    %48 = vector.shape_cast %47 : vector<1x32x4xf32> to vector<32x4xf32>
    %cst_35 = arith.constant dense<0.000000e+00> : vector<32x64xf32>
    %49 = tpu.matmul %48, %40, %cst_35 {dimension_numbers = #tpu.dot_dimension_numbers<[1], [0], [0], [1], [0, 0, 1, 1], [], []>} : vector<32x4xf32>, vector<4x64xf32>, vector<32x64xf32> -> vector<32x64xf32>
    %50 = vector.broadcast %42 : vector<32x1xf32> to vector<32x64xf32>
    %51 = arith.addf %49, %50 : vector<32x64xf32>
    %cst_36 = arith.constant dense<0.000000e+00> : vector<32xf32>
    %52 = vector.multi_reduction <add>, %51, %cst_36 [1] : vector<32x64xf32> to vector<32xf32>
    %53 = vector.shape_cast %52 : vector<32xf32> to vector<32x1xf32>
    %cst_37 = arith.constant 1.562500e-02 : f32
    %54 = vector.broadcast %cst_37 : f32 to vector<32x1xf32>
    %55 = arith.mulf %53, %54 : vector<32x1xf32>
    %56 = arith.mulf %51, %51 : vector<32x64xf32>
    %cst_38 = arith.constant dense<0.000000e+00> : vector<32xf32>
    %57 = vector.multi_reduction <add>, %56, %cst_38 [1] : vector<32x64xf32> to vector<32xf32>
    %58 = vector.shape_cast %57 : vector<32xf32> to vector<32x1xf32>
    %cst_39 = arith.constant 1.562500e-02 : f32
    %59 = vector.broadcast %cst_39 : f32 to vector<32x1xf32>
    %60 = arith.mulf %58, %59 : vector<32x1xf32>
    %61 = arith.mulf %55, %55 : vector<32x1xf32>
    %62 = arith.subf %60, %61 : vector<32x1xf32>
    %cst_40 = arith.constant 0.000000e+00 : f32
    %63 = vector.broadcast %cst_40 : f32 to vector<32x1xf32>
    %64 = arith.maximumf %62, %63 : vector<32x1xf32>
    %cst_41 = arith.constant 9.99999974E-6 : f32
    %65 = vector.broadcast %cst_41 : f32 to vector<32x1xf32>
    %66 = arith.addf %64, %65 : vector<32x1xf32>
    %67 = math.rsqrt %66 : vector<32x1xf32>
    %68 = arith.mulf %44, %67 : vector<32x1xf32>
    %69 = arith.mulf %55, %68 : vector<32x1xf32>
    %70 = arith.subf %46, %69 : vector<32x1xf32>
    %71 = vector.broadcast %68 : vector<32x1xf32> to vector<32x64xf32>
    %72 = arith.mulf %51, %71 : vector<32x64xf32>
    %73 = vector.broadcast %70 : vector<32x1xf32> to vector<32x64xf32>
    %74 = arith.addf %72, %73 : vector<32x64xf32>
    %c0_42 = arith.constant 0 : index
    %c0_43 = arith.constant 0 : index
    %c256_44 = arith.constant 256 : index
    %75 = vector.load %arg4[%c0_42, %c0_43, %c256_44] : memref<1x32x320xf32, #tpu.memory_space<vmem>>, vector<1x32x64xf32>
    %76 = vector.shape_cast %75 : vector<1x32x64xf32> to vector<32x64xf32>
    %77 = vector.shape_cast %74 : vector<32x64xf32> to vector<1x32x64xf32>
    tpu.vector_store %arg4[%c0_42, %c0_43, %c256_44], %77 {strides = array<i32>} : memref<1x32x320xf32, #tpu.memory_space<vmem>>, vector<1x32x64xf32>,
    return
  }
  func.func @transform_0(%arg0: i32) -> (i32, i32, i32) {
    %c0_i32 = arith.constant 0 : i32
    %c0_i32_0 = arith.constant 0 : i32
    %c0_i32_1 = arith.constant 0 : i32
    return %arg0, %c0_i32, %c0_i32_0 : i32, i32, i32
  }
  func.func @transform_1(%arg0: i32) -> (i32, i32, i32) {
    %c0_i32 = arith.constant 0 : i32
    %c0_i32_0 = arith.constant 0 : i32
    %c0_i32_1 = arith.constant 0 : i32
    %c0_i32_2 = arith.constant 0 : i32
    return %c0_i32, %c0_i32_0, %c0_i32_1 : i32, i32, i32
  }
  func.func @transform_2(%arg0: i32) -> (i32, i32, i32) {
    %c0_i32 = arith.constant 0 : i32
    %c0_i32_0 = arith.constant 0 : i32
    %c0_i32_1 = arith.constant 0 : i32
    %c0_i32_2 = arith.constant 0 : i32
    return %c0_i32, %c0_i32_0, %c0_i32_1 : i32, i32, i32
  }
  func.func @transform_3(%arg0: i32) -> (i32, i32, i32) {
    %c0_i32 = arith.constant 0 : i32
    %c0_i32_0 = arith.constant 0 : i32
    %c0_i32_1 = arith.constant 0 : i32
    return %arg0, %c0_i32, %c0_i32_0 : i32, i32, i32
  }
}

</mosaic_0001>

<llo_original>
// kernel: tpu_custom_call.1
$region0: #{tpu_custom_call.1}
  #allocation0 [shape = 'u32[]', space=smem, size = 0x4, offset = 0x4, fixed_abs, tag = 'smem constant byte address 0x4 - core index']
  #allocation1 [shape = 'u32[144,128]{1,0:T(1,128)}', space=vmem, size = 0x12000, scoped, tag = 'internal scratch']
  %s0 = inlined_call_operand.vmem [shape: f32[2,4,320], index: 0, kind: input, shape index: {}]
  %s1 = inlined_call_operand.vmem [shape: f32[2,32,4], index: 1, kind: input, shape index: {}]
  %s2 = inlined_call_operand.vmem [shape: f32[2,32,3], index: 2, kind: input, shape index: {}]
  %s3 = inlined_call_operand.hbm [shape: f32[2,32,320], index: 3, kind: output, shape index: {}]
  %s4 = sld [smem:[#allocation0]]
  $region45: #{tpu_custom_call.1} parent=0
    _
  %s6 = ssub.s32 1, %s4
  %s7 = scalar_select 0, %s6, %s4
  $region1: #{tpu_custom_call.1} parent=0
    #allocation2 [shape = 'u8[98304]{0}', space=vmem, size = 0x18000, scoped, tag = 'output window, operand 0']
    #allocation3 [shape = 's32[2]{0}', space=sflag, size = 0x8, scoped, tag = 'scoped memory for tpu_custom_call.1']
    %8 = vsyncpa [#allocation3], 0
    %s9 = scalar_lea.sflag [#allocation3], 1
    %10 = vsyncpa %s9, 0
    loop: start=0, step=1, limit=4
    $region2: #{tpu_custom_call.1} parent=1 // loop_pre_header
      _
    $region3: #{tpu_custom_call.1} parent=1 // loop_header
      %s12 = sphi 0, %s16
      %p13 = scmp.ge.s32.totalorder %s12, 4
      %s22 = sphi 0, %s24
      %s25 = sphi 0, %s22
      %s26 = sphi 0, %s25
      %s42 = sphi 0, %s26
      %s46 = sphi 0, %s46
      %s48 = sphi 0, %s46
      %s49 = sphi 0, %s48
      %s63 = sphi 0, %s49
      %s67 = sphi 0, %s67
      %s69 = sphi 0, %s67
      %s70 = sphi 0, %s69
      %s84 = sphi 0, %s70
      %s90 = sphi 0, %s92
      %s93 = sphi 0, %s90
      %s94 = sphi 0, %s93
      %s110 = sphi 0, %s94
    $region4: #{tpu_custom_call.1} parent=1 // loop_header_branch
      %15 = sbr.rel (%p13) target = $region8
    $region5: #{tpu_custom_call.1} parent=1 // loop_body
      %s17 = ssub.s32 %s12, 1
      %s18 = ssub.s32 %s12, 2
      %s19 = sadd.s32 %s12, 1
      %s20 = ssub.s32 %s12, %s19
      %p21 = scmp.eq.s32.totalorder %s20, 0
      %s23 = sadd.s32 %s22, 1
      %s24 = scalar_select %p21, %s22, %s23
      %p27 = pneg %p21
      %p28 = scmp.eq.s32.totalorder %s12, 1
      %p29 = por %p27, %p28
      %p30 = scmp.ne.s32.totalorder %s22, %s25
      %p31 = scmp.eq.s32.totalorder %s12, 0
      %p32 = por %p30, %p31
      %p33 = scmp.ne.s32.totalorder %s22, %s25
      %p34 = scmp.eq.s32.totalorder %s17, 1
      %p35 = por %p33, %p34
      %p36 = scmp.ne.s32.totalorder %s25, %s26
      %p37 = scmp.eq.s32.totalorder %s17, 0
      %p38 = por %p36, %p37
      %p39 = scmp.ne.s32.totalorder %s25, %s26
      %p40 = scmp.eq.s32.totalorder %s18, 1
      %p41 = por %p39, %p40
      %p43 = scmp.ne.s32.totalorder %s26, %s42
      %p44 = scmp.eq.s32.totalorder %s18, 0
      %p45 = por %p43, %p44
      %s47 = sadd.s32 %s46, 1
      %p50 = scmp.eq.s32.totalorder %s12, 1
      %p51 = scmp.ne.s32.totalorder %s46, %s48
      %p52 = scmp.eq.s32.totalorder %s12, 0
      %p53 = por %p51, %p52
      %p54 = scmp.ne.s32.totalorder %s46, %s48
      %p55 = scmp.eq.s32.totalorder %s17, 1
      %p56 = por %p54, %p55
      %p57 = scmp.ne.s32.totalorder %s48, %s49
      %p58 = scmp.eq.s32.totalorder %s17, 0
      %p59 = por %p57, %p58
      %p60 = scmp.ne.s32.totalorder %s48, %s49
      %p61 = scmp.eq.s32.totalorder %s18, 1
      %p62 = por %p60, %p61
      %p64 = scmp.ne.s32.totalorder %s49, %s63
      %p65 = scmp.eq.s32.totalorder %s18, 0
      %p66 = por %p64, %p65
      %s68 = sadd.s32 %s67, 1
      %p71 = scmp.eq.s32.totalorder %s12, 1
      %p72 = scmp.ne.s32.totalorder %s67, %s69
      %p73 = scmp.eq.s32.totalorder %s12, 0
      %p74 = por %p72, %p73
      %p75 = scmp.ne.s32.totalorder %s67, %s69
      %p76 = scmp.eq.s32.totalorder %s17, 1
      %p77 = por %p75, %p76
      %p78 = scmp.ne.s32.totalorder %s69, %s70
      %p79 = scmp.eq.s32.totalorder %s17, 0
      %p80 = por %p78, %p79
      %p81 = scmp.ne.s32.totalorder %s69, %s70
      %p82 = scmp.eq.s32.totalorder %s18, 1
      %p83 = por %p81, %p82
      %p85 = scmp.ne.s32.totalorder %s70, %s84
      %p86 = scmp.eq.s32.totalorder %s18, 0
      %p87 = por %p85, %p86
      %s88 = ssub.s32 %s12, %s19
      %p89 = scmp.eq.s32.totalorder %s88, 0
      %s91 = sadd.s32 %s90, 1
      %s92 = scalar_select %p89, %s90, %s91
      %p95 = pneg %p89
      %p96 = scmp.eq.s32.totalorder %s12, 1
      %p97 = por %p95, %p96
      %p98 = scmp.ne.s32.totalorder %s90, %s93
      %p99 = scmp.eq.s32.totalorder %s12, 0
      %p100 = por %p98, %p99
      %p101 = scmp.ne.s32.totalorder %s90, %s93
      %p102 = scmp.eq.s32.totalorder %s17, 1
      %p103 = por %p101, %p102
      %p104 = scmp.ne.s32.totalorder %s93, %s94
      %p105 = scmp.eq.s32.totalorder %s17, 0
      %p106 = por %p104, %p105
      %p107 = scmp.ne.s32.totalorder %s93, %s94
      %p108 = scmp.eq.s32.totalorder %s18, 1
      %p109 = por %p107, %p108
      %p111 = scmp.ne.s32.totalorder %s94, %s110
      %p112 = scmp.eq.s32.totalorder %s18, 0
      %p113 = por %p111, %p112
      %p114 = scmp.le.s32.totalorder 1, %s12
      %p115 = scmp.lt.s32.totalorder %s12, 3
      %p116 = pnand %p114, %p115
      %p117 = pneg %p116
      // Predicated region
      $region9: #{tpu_custom_call.1} parent=5 // pred_check
        _
      $region10: #{tpu_custom_call.1} parent=5 // pred_check_branch
        %119 = sbr.rel (%p116) target = $region12
      $region11: #{tpu_custom_call.1} parent=5 // pred_region
        %s120 = ssub.s32 %s12, 1
        // Predicated region
        $region13: #{tpu_custom_call.1} parent=11 // pred_check
          %p121 = pneg %p59
        $region14: #{tpu_custom_call.1} parent=11 // pred_check_branch
          %123 = sbr.rel (%p121) target = $region16
        $region15: #{tpu_custom_call.1} parent=11 // pred_region
          _
        $region16: #{tpu_custom_call.1} parent=11 // pred_fallthru
          _
        // Predicated region
        $region17: #{tpu_custom_call.1} parent=11 // pred_check
          %p124 = pneg %p80
        $region18: #{tpu_custom_call.1} parent=11 // pred_check_branch
          %126 = sbr.rel (%p124) target = $region20
        $region19: #{tpu_custom_call.1} parent=11 // pred_region
          _
        $region20: #{tpu_custom_call.1} parent=11 // pred_fallthru
          _
      $region12: #{tpu_custom_call.1} parent=5 // pred_fallthru
        _
      %p127 = scmp.lt.s32.totalorder %s12, 2
      // Predicated region
      $region21: #{tpu_custom_call.1} parent=5 // pred_check
        %p128 = pneg %p127
      $region22: #{tpu_custom_call.1} parent=5 // pred_check_branch
        %130 = sbr.rel (%p128) target = $region24
      $region23: #{tpu_custom_call.1} parent=5 // pred_region
        // Predicated region
        $region25: #{tpu_custom_call.1} parent=23 // pred_check
          %p131 = pneg %p32
        $region26: #{tpu_custom_call.1} parent=23 // pred_check_branch
          %133 = sbr.rel (%p131) target = $region28
        $region27: #{tpu_custom_call.1} parent=23 // pred_region
          %p134 = scmp.lt.s32.totalorder %s12, 1
          %s135 = scalar_select %p134, %s12, 1
          %s136 = smul.addr %s135, 3
          %s137 = smul.addr %s136, 4
          %s138 = scalar_lea.vmem %s0, %s137
        $region28: #{tpu_custom_call.1} parent=23 // pred_fallthru
          _
      $region24: #{tpu_custom_call.1} parent=5 // pred_fallthru
        _
      %p139 = scmp.le.s32.totalorder 1, %s12
      %p140 = scmp.lt.s32.totalorder %s12, 3
      %p141 = pnand %p139, %p140
      %p142 = pneg %p141
      // Predicated region
      $region29: #{tpu_custom_call.1} parent=5 // pred_check
        _
      $region30: #{tpu_custom_call.1} parent=5 // pred_check_branch
        %144 = sbr.rel (%p141) target = $region32
      $region31: #{tpu_custom_call.1} parent=5 // pred_region
        %s145 = ssub.s32 %s12, 1
        %p146 = scmp.lt.s32.totalorder %s17, 1
        %s147 = scalar_select %p146, %s17, 1
        %s148 = smul.addr %s147, 3
        %s149 = smul.addr %s148, 4
        %s150 = scalar_lea.vmem %s0, %s149
        %p151 = pneg %p38
        %p152 = pneg %p35
        %p153 = pneg %p59
        %p154 = pneg %p56
        %p155 = pneg %p80
        %p156 = pneg %p77
        %p157 = pneg %p106
        %p158 = pneg %p103
        %s159 = sand.u32 %s93, 1
        %s160 = scalar_lea.sflag [#allocation3], %s159
        %s161 = sand.u32 %s93, 1
        %s162 = smul.addr %s161, 96
        %s163 = scalar_lea.vmem [#allocation2], %s162
        %p164 = scmp.lt.s32.totalorder %s17, 1
        %s165 = scalar_select %p164, %s17, 1
        %s166 = smul.addr %s165, 3
        %s167 = smul.addr %s166, 4
        %s168 = scalar_lea.vmem %s0, %s167
        %v169 = vld [vmem:[%s168] sm:$0xff]
        %v170 = vld [vmem:[%s2] sm:$0xff]
        %v171 = vld [vmem:[%s2 + $0x8] sm:$0xff]
        %v172 = vld [vmem:[%s2 + $0x10] sm:$0xff]
        %v173 = vld [vmem:[%s2 + $0x18] sm:$0xff]
        %v174 = vld [vmem:[%s1] sm:$0xff]
        %v175 = vld [vmem:[%s1 + $0x8] sm:$0xff]
        %v176 = vld [vmem:[%s1 + $0x10] sm:$0xff]
        %v177 = vld [vmem:[%s1 + $0x18] sm:$0xff]
        %179 = vset.pattern.permute.xlu0 0
        %180 = vperm.xlu0 %179, %v170
        %v181 = vpop.permute.xlu0 %180
        %184 = vset.pattern.permute.xlu0 0
        %185 = vperm.xlu0 %184, %v171
        %v186 = vpop.permute.xlu0 %185
        %189 = vset.pattern.permute.xlu0 0
        %190 = vperm.xlu0 %189, %v172
        %v191 = vpop.permute.xlu0 %190
        %194 = vset.pattern.permute.xlu0 0
        %195 = vperm.xlu0 %194, %v173
        %v196 = vpop.permute.xlu0 %195
        %v199 = vcombine.high %v169, %v169
        %vm200 = vcmask 31744
        %v202 = vsel %vm200, %v174, 0
        %v205 = vsel %vm200, %v175, 0
        %v208 = vsel %vm200, %v176, 0
        %v211 = vsel %vm200, %v177, 0
        %vm213 = vcmask 1043456
        %v214 = vsel %vm213, %v169, 0
        %v216 = vsel %vm213, %v199, 0
        %218 = vmatprep.subr.mxu0 %v216
        %219 = vmatpush1.msra.mxu0 %v214
        %220 = vmatprep.subr.mxu0 0.0
        %221 = vmatpush1.msra.mxu0 0.0
        %222 = vmatprep.subr.mxu0 0.0
        %223 = vmatpush1.msra.mxu0 0.0
        %224 = vmatprep.subr.mxu0 0.0
        %225 = vmatpush1.msra.mxu0 0.0
        %226 = vmatprep.subr.mxu0 0.0
        %227 = vmatpush1.msra.mxu0 0.0
        %228 = vmatprep.subr.mxu0 0.0
        %229 = vmatpush1.msra.mxu0 0.0
        %230 = vmatprep.subr.mxu0 0.0
        %231 = vmatpush1.msra.mxu0 0.0
        %232 = vmatprep.subr.mxu0 0.0
        %233 = vmatpush1.msra.mxu0 0.0
        %234 = vmatprep.subr.mxu0 0.0
        %235 = vmatpush1.msra.mxu0 0.0
        %236 = vmatprep.subr.mxu0 0.0
        %237 = vmatpush1.msra.mxu0 0.0
        %238 = vmatprep.subr.mxu0 0.0
        %239 = vmatpush1.msra.mxu0 0.0
        %240 = vmatprep.subr.mxu0 0.0
        %241 = vmatpush1.msra.mxu0 0.0
        %242 = vmatprep.subr.mxu0 0.0
        %243 = vmatpush1.msra.mxu0 0.0
        %244 = vmatprep.subr.mxu0 0.0
        %245 = vmatpush1.msra.mxu0 0.0
        %246 = vmatprep.subr.mxu0 0.0
        %247 = vmatpush1.msra.mxu0 0.0
        %248 = vmatprep.subr.mxu0 0.0
        %249 = vmatpush1.msra.mxu0 0.0
        %250 = vmatprep.subr.mxu0 0.0
        %251 = vmatpush1.msra.mxu0 0.0
        %252 = vmatprep.subr.mxu0 0.0
        %253 = vmatpush1.msra.mxu0 0.0
        %254 = vmatprep.subr.mxu0 0.0
        %255 = vmatpush1.msra.mxu0 0.0
        %256 = vmatprep.subr.mxu0 0.0
        %257 = vmatpush1.msra.mxu0 0.0
        %258 = vmatprep.subr.mxu0 0.0
        %259 = vmatpush1.msra.mxu0 0.0
        %260 = vmatprep.subr.mxu0 0.0
        %261 = vmatpush1.msra.mxu0 0.0
        %262 = vmatprep.subr.mxu0 0.0
        %263 = vmatpush1.msra.mxu0 0.0
        %264 = vmatprep.subr.mxu0 0.0
        %265 = vmatpush1.msra.mxu0 0.0
        %266 = vmatprep.subr.mxu0 0.0
        %267 = vmatpush1.msra.mxu0 0.0
        %268 = vmatprep.subr.mxu0 0.0
        %269 = vmatpush1.msra.mxu0 0.0
        %270 = vmatprep.subr.mxu0 0.0
        %271 = vmatpush1.msra.mxu0 0.0
        %272 = vmatprep.subr.mxu0 0.0
        %273 = vmatpush1.msra.mxu0 0.0
        %274 = vmatprep.subr.mxu0 0.0
        %275 = vmatpush1.msra.mxu0 0.0
        %276 = vmatprep.subr.mxu0 0.0
        %277 = vmatpush1.msra.mxu0 0.0
        %278 = vmatprep.subr.mxu0 0.0
        %279 = vmatpush1.msra.mxu0 0.0
        %280 = vmatprep.subr.mxu0 0.0
        %281 = vmatpush1.msra.mxu0 0.0
        %282 = vmatprep.mubr.f32.mxu0 0.0
        %283 = vmatmul.mubr.f32.gmra.mrb[0].mxu0 %v202
        %v284 = vpop.f32.mrb[0].mxu0
        %v285 = vadd.f32 %v181, %v284
        %v286 = vpop.f32.mrb[0].mxu0
        %v287 = vadd.f32 %v181, %v286
        %288 = vmatprep.mubr.f32.mxu0 0.0
        %289 = vmatmul.mubr.f32.gmra.mrb[0].mxu0 %v205
        %v290 = vpop.f32.mrb[0].mxu0
        %v291 = vadd.f32 %v186, %v290
        %v292 = vpop.f32.mrb[0].mxu0
        %v293 = vadd.f32 %v186, %v292
        %294 = vmatprep.mubr.f32.mxu0 0.0
        %295 = vmatmul.mubr.f32.gmra.mrb[0].mxu0 %v208
        %v296 = vpop.f32.mrb[0].mxu0
        %v297 = vadd.f32 %v191, %v296
        %v298 = vpop.f32.mrb[0].mxu0
        %v299 = vadd.f32 %v191, %v298
        %300 = vmatprep.mubr.f32.mxu0 0.0
        %301 = vmatmul.mubr.f32.gmra.mrb[0].mxu0 %v211
        %v302 = vpop.f32.mrb[0].mxu0
        %v303 = vadd.f32 %v196, %v302
        %v304 = vpop.f32.mrb[0].mxu0
        %v305 = vadd.f32 %v196, %v304
        %306 = vdwg.mxu0
        %v307 = vadd.f32 %v285, %v287
        %308 = vadd.xlane.f32.xlu0 %v307
        %v309 = vpop.xlane.xlu0 %308
        %v310 = vadd.f32 %v291, %v293
        %311 = vadd.xlane.f32.xlu0 %v310
        %v312 = vpop.xlane.xlu0 %311
        %v313 = vadd.f32 %v297, %v299
        %314 = vadd.xlane.f32.xlu0 %v313
        %v315 = vpop.xlane.xlu0 %314
        %v316 = vadd.f32 %v303, %v305
        %317 = vadd.xlane.f32.xlu0 %v316
        %v318 = vpop.xlane.xlu0 %317
        %v319 = vmul.f32 %v309, 0.00390625
        %v320 = vmul.f32 %v312, 0.00390625
        %v321 = vmul.f32 %v315, 0.00390625
        %v322 = vmul.f32 %v318, 0.00390625
        %v323 = vmul.f32 %v285, %v285
        %v324 = vmul.f32 %v287, %v287
        %v325 = vmul.f32 %v291, %v291
        %v326 = vmul.f32 %v293, %v293
        %v327 = vmul.f32 %v297, %v297
        %v328 = vmul.f32 %v299, %v299
        %v329 = vmul.f32 %v303, %v303
        %v330 = vmul.f32 %v305, %v305
        %v331 = vadd.f32 %v323, %v324
        %332 = vadd.xlane.f32.xlu0 %v331
        %v333 = vpop.xlane.xlu0 %332
        %v334 = vadd.f32 %v325, %v326
        %335 = vadd.xlane.f32.xlu0 %v334
        %v336 = vpop.xlane.xlu0 %335
        %v337 = vadd.f32 %v327, %v328
        %338 = vadd.xlane.f32.xlu0 %v337
        %v339 = vpop.xlane.xlu0 %338
        %v340 = vadd.f32 %v329, %v330
        %341 = vadd.xlane.f32.xlu0 %v340
        %v342 = vpop.xlane.xlu0 %341
        %v343 = vmul.f32 %v333, 0.00390625
        %v344 = vmul.f32 %v336, 0.00390625
        %v345 = vmul.f32 %v339, 0.00390625
        %v346 = vmul.f32 %v342, 0.00390625
        %v347 = vmul.f32 %v319, %v319
        %v348 = vmul.f32 %v320, %v320
        %v349 = vmul.f32 %v321, %v321
        %v350 = vmul.f32 %v322, %v322
        %v351 = vsub.f32 %v343, %v347
        %v352 = vsub.f32 %v344, %v348
        %v353 = vsub.f32 %v345, %v349
        %v354 = vsub.f32 %v346, %v350
        %v355 = vmax.f32 %v351, 0.0
        %v356 = vmax.f32 %v352, 0.0
        %v357 = vmax.f32 %v353, 0.0
        %v358 = vmax.f32 %v354, 0.0
        %v359 = vadd.f32 %v355, 1e-05
        %v360 = vadd.f32 %v356, 1e-05
        %v361 = vadd.f32 %v357, 1e-05
        %v362 = vadd.f32 %v358, 1e-05
        %v363 = vrsqrt.pop %v359
        %v364 = vrsqrt.pop %v360
        %v365 = vrsqrt.pop %v361
        %v366 = vrsqrt.pop %v362
        %v367 = vmul.f32 %v170, %v363
        %v368 = vmul.f32 %v171, %v364
        %v369 = vmul.f32 %v172, %v365
        %v370 = vmul.f32 %v173, %v366
        %v371 = vmul.f32 %v319, %v367
        %v372 = vmul.f32 %v320, %v368
        %v373 = vmul.f32 %v321, %v369
        %v374 = vmul.f32 %v322, %v370
        %379 = vrot.lane.b32.xlu0 %v371, 1
        %v380 = vpop.permute.xlu0 %379
        %381 = vrot.lane.b32.xlu0 %v372, 1
        %v382 = vpop.permute.xlu0 %381
        %383 = vrot.lane.b32.xlu0 %v373, 1
        %v384 = vpop.permute.xlu0 %383
        %385 = vrot.lane.b32.xlu0 %v374, 1
        %v386 = vpop.permute.xlu0 %385
        %v391 = vsub.f32 %v170, %v380
        %v392 = vsub.f32 %v171, %v382
        %v393 = vsub.f32 %v172, %v384
        %v394 = vsub.f32 %v173, %v386
        %396 = vset.pattern.permute.xlu0 1
        %397 = vperm.xlu0 %396, %v367
        %v398 = vpop.permute.xlu0 %397
        %401 = vset.pattern.permute.xlu0 1
        %402 = vperm.xlu0 %401, %v368
        %v403 = vpop.permute.xlu0 %402
        %406 = vset.pattern.permute.xlu0 1
        %407 = vperm.xlu0 %406, %v369
        %v408 = vpop.permute.xlu0 %407
        %411 = vset.pattern.permute.xlu0 1
        %412 = vperm.xlu0 %411, %v370
        %v413 = vpop.permute.xlu0 %412
        %v415 = vmul.f32 %v285, %v398
        %v416 = vmul.f32 %v287, %v398
        %v417 = vmul.f32 %v291, %v403
        %v418 = vmul.f32 %v293, %v403
        %v419 = vmul.f32 %v297, %v408
        %v420 = vmul.f32 %v299, %v408
        %v421 = vmul.f32 %v303, %v413
        %v422 = vmul.f32 %v305, %v413
        %424 = vset.pattern.permute.xlu0 2
        %425 = vperm.xlu0 %424, %v391
        %v426 = vpop.permute.xlu0 %425
        %429 = vset.pattern.permute.xlu0 2
        %430 = vperm.xlu0 %429, %v392
        %v431 = vpop.permute.xlu0 %430
        %434 = vset.pattern.permute.xlu0 2
        %435 = vperm.xlu0 %434, %v393
        %v436 = vpop.permute.xlu0 %435
        %439 = vset.pattern.permute.xlu0 2
        %440 = vperm.xlu0 %439, %v394
        %v441 = vpop.permute.xlu0 %440
        %v443 = vadd.f32 %v415, %v426
        %v444 = vadd.f32 %v416, %v426
        %v445 = vadd.f32 %v417, %v431
        %v446 = vadd.f32 %v418, %v431
        %v447 = vadd.f32 %v419, %v436
        %v448 = vadd.f32 %v420, %v436
        %v449 = vadd.f32 %v421, %v441
        %v450 = vadd.f32 %v422, %v441
        %451 = vst [vmem:[%s163] sm:$0xff] %v443
        %452 = vst [vmem:[%s163 + $0x8] sm:$0xff] %v444
        %453 = vst [vmem:[%s163 + $0x18] sm:$0xff] %v445
        %454 = vst [vmem:[%s163 + $0x20] sm:$0xff] %v446
        %455 = vst [vmem:[%s163 + $0x30] sm:$0xff] %v447
        %456 = vst [vmem:[%s163 + $0x38] sm:$0xff] %v448
        %457 = vst [vmem:[%s163 + $0x48] sm:$0xff] %v449
        %458 = vst [vmem:[%s163 + $0x50] sm:$0xff] %v450
        %v459 = vld [vmem:[%s168 + $0x8] sm:$0xf]
        %s460 = scalar_lea.vmem %s2, 32
        %v461 = vld [vmem:[%s460] sm:$0xff]
        %v462 = vld [vmem:[%s460 + $0x8] sm:$0xff]
        %v463 = vld [vmem:[%s460 + $0x10] sm:$0xff]
        %v464 = vld [vmem:[%s460 + $0x18] sm:$0xff]
        %s465 = scalar_lea.vmem %s1, 32
        %v466 = vld [vmem:[%s465] sm:$0xff]
        %v467 = vld [vmem:[%s465 + $0x8] sm:$0xff]
        %v468 = vld [vmem:[%s465 + $0x10] sm:$0xff]
        %v469 = vld [vmem:[%s465 + $0x18] sm:$0xff]
        %471 = vset.pattern.permute.xlu0 0
        %472 = vperm.xlu0 %471, %v461
        %v473 = vpop.permute.xlu0 %472
        %476 = vset.pattern.permute.xlu0 0
        %477 = vperm.xlu0 %476, %v462
        %v478 = vpop.permute.xlu0 %477
        %481 = vset.pattern.permute.xlu0 0
        %482 = vperm.xlu0 %481, %v463
        %v483 = vpop.permute.xlu0 %482
        %486 = vset.pattern.permute.xlu0 0
        %487 = vperm.xlu0 %486, %v464
        %v488 = vpop.permute.xlu0 %487
        %v491 = vsel %vm200, %v466, 0
        %v494 = vsel %vm200, %v467, 0
        %v497 = vsel %vm200, %v468, 0
        %v500 = vsel %vm200, %v469, 0
        %v503 = vsel %vm213, %v459, 0
        %505 = vmatprep.subr.mxu0 0.0
        %506 = vmatpush1.msra.mxu0 %v503
        %507 = vmatprep.subr.mxu0 0.0
        %508 = vmatpush1.msra.mxu0 0.0
        %509 = vmatprep.subr.mxu0 0.0
        %510 = vmatpush1.msra.mxu0 0.0
        %511 = vmatprep.subr.mxu0 0.0
        %512 = vmatpush1.msra.mxu0 0.0
        %513 = vmatprep.subr.mxu0 0.0
        %514 = vmatpush1.msra.mxu0 0.0
        %515 = vmatprep.subr.mxu0 0.0
        %516 = vmatpush1.msra.mxu0 0.0
        %517 = vmatprep.subr.mxu0 0.0
        %518 = vmatpush1.msra.mxu0 0.0
        %519 = vmatprep.subr.mxu0 0.0
        %520 = vmatpush1.msra.mxu0 0.0
        %521 = vmatprep.subr.mxu0 0.0
        %522 = vmatpush1.msra.mxu0 0.0
        %523 = vmatprep.subr.mxu0 0.0
        %524 = vmatpush1.msra.mxu0 0.0
        %525 = vmatprep.subr.mxu0 0.0
        %526 = vmatpush1.msra.mxu0 0.0
        %527 = vmatprep.subr.mxu0 0.0
        %528 = vmatpush1.msra.mxu0 0.0
        %529 = vmatprep.subr.mxu0 0.0
        %530 = vmatpush1.msra.mxu0 0.0
        %531 = vmatprep.subr.mxu0 0.0
        %532 = vmatpush1.msra.mxu0 0.0
        %533 = vmatprep.subr.mxu0 0.0
        %534 = vmatpush1.msra.mxu0 0.0
        %535 = vmatprep.subr.mxu0 0.0
        %536 = vmatpush1.msra.mxu0 0.0
        %537 = vmatprep.subr.mxu0 0.0
        %538 = vmatpush1.msra.mxu0 0.0
        %539 = vmatprep.subr.mxu0 0.0
        %540 = vmatpush1.msra.mxu0 0.0
        %541 = vmatprep.subr.mxu0 0.0
        %542 = vmatpush1.msra.mxu0 0.0
        %543 = vmatprep.subr.mxu0 0.0
        %544 = vmatpush1.msra.mxu0 0.0
        %545 = vmatprep.subr.mxu0 0.0
        %546 = vmatpush1.msra.mxu0 0.0
        %547 = vmatprep.subr.mxu0 0.0
        %548 = vmatpush1.msra.mxu0 0.0
        %549 = vmatprep.subr.mxu0 0.0
        %550 = vmatpush1.msra.mxu0 0.0
        %551 = vmatprep.subr.mxu0 0.0
        %552 = vmatpush1.msra.mxu0 0.0
        %553 = vmatprep.subr.mxu0 0.0
        %554 = vmatpush1.msra.mxu0 0.0
        %555 = vmatprep.subr.mxu0 0.0
        %556 = vmatpush1.msra.mxu0 0.0
        %557 = vmatprep.subr.mxu0 0.0
        %558 = vmatpush1.msra.mxu0 0.0
        %559 = vmatprep.subr.mxu0 0.0
        %560 = vmatpush1.msra.mxu0 0.0
        %561 = vmatprep.subr.mxu0 0.0
        %562 = vmatpush1.msra.mxu0 0.0
        %563 = vmatprep.subr.mxu0 0.0
        %564 = vmatpush1.msra.mxu0 0.0
        %565 = vmatprep.subr.mxu0 0.0
        %566 = vmatpush1.msra.mxu0 0.0
        %567 = vmatprep.subr.mxu0 0.0
        %568 = vmatpush1.msra.mxu0 0.0
        %569 = vmatprep.mubr.f32.mxu0 0.0
        %570 = vmatmul.mubr.f32.gmra.mrb[0].mxu0 %v491
        %v571 = vpop.f32.mrb[0].mxu0
        %v572 = vadd.f32 %v473, %v571
        %v573 = vpop.f32.mrb[0].mxu0
        %574 = vmatprep.mubr.f32.mxu0 0.0
        %575 = vmatmul.mubr.f32.gmra.mrb[0].mxu0 %v494
        %v576 = vpop.f32.mrb[0].mxu0
        %v577 = vadd.f32 %v478, %v576
        %v578 = vpop.f32.mrb[0].mxu0
        %579 = vmatprep.mubr.f32.mxu0 0.0
        %580 = vmatmul.mubr.f32.gmra.mrb[0].mxu0 %v497
        %v581 = vpop.f32.mrb[0].mxu0
        %v582 = vadd.f32 %v483, %v581
        %v583 = vpop.f32.mrb[0].mxu0
        %584 = vmatprep.mubr.f32.mxu0 0.0
        %585 = vmatmul.mubr.f32.gmra.mrb[0].mxu0 %v500
        %v586 = vpop.f32.mrb[0].mxu0
        %v587 = vadd.f32 %v488, %v586
        %v588 = vpop.f32.mrb[0].mxu0
        %589 = vdwg.mxu0
        %vm590 = vcmask 523264
        %v591 = vsel %vm590, %v572, 0.0
        %592 = vadd.xlane.f32.xlu0 %v591
        %v593 = vpop.xlane.xlu0 %592
        %v594 = vsel %vm590, %v577, 0.0
        %595 = vadd.xlane.f32.xlu0 %v594
        %v596 = vpop.xlane.xlu0 %595
        %v597 = vsel %vm590, %v582, 0.0
        %598 = vadd.xlane.f32.xlu0 %v597
        %v599 = vpop.xlane.xlu0 %598
        %v600 = vsel %vm590, %v587, 0.0
        %601 = vadd.xlane.f32.xlu0 %v600
        %v602 = vpop.xlane.xlu0 %601
        %v603 = vmul.f32 %v593, 0.015625
        %v604 = vmul.f32 %v596, 0.015625
        %v605 = vmul.f32 %v599, 0.015625
        %v606 = vmul.f32 %v602, 0.015625
        %v607 = vmul.f32 %v572, %v572
        %v608 = vmul.f32 %v577, %v577
        %v609 = vmul.f32 %v582, %v582
        %v610 = vmul.f32 %v587, %v587
        %v611 = vsel %vm590, %v607, 0.0
        %612 = vadd.xlane.f32.xlu0 %v611
        %v613 = vpop.xlane.xlu0 %612
        %v614 = vsel %vm590, %v608, 0.0
        %615 = vadd.xlane.f32.xlu0 %v614
        %v616 = vpop.xlane.xlu0 %615
        %v617 = vsel %vm590, %v609, 0.0
        %618 = vadd.xlane.f32.xlu0 %v617
        %v619 = vpop.xlane.xlu0 %618
        %v620 = vsel %vm590, %v610, 0.0
        %621 = vadd.xlane.f32.xlu0 %v620
        %v622 = vpop.xlane.xlu0 %621
        %v623 = vmul.f32 %v613, 0.015625
        %v624 = vmul.f32 %v616, 0.015625
        %v625 = vmul.f32 %v619, 0.015625
        %v626 = vmul.f32 %v622, 0.015625
        %v627 = vmul.f32 %v603, %v603
        %v628 = vmul.f32 %v604, %v604
        %v629 = vmul.f32 %v605, %v605
        %v630 = vmul.f32 %v606, %v606
        %v631 = vsub.f32 %v623, %v627
        %v632 = vsub.f32 %v624, %v628
        %v633 = vsub.f32 %v625, %v629
        %v634 = vsub.f32 %v626, %v630
        %v635 = vmax.f32 %v631, 0.0
        %v636 = vmax.f32 %v632, 0.0
        %v637 = vmax.f32 %v633, 0.0
        %v638 = vmax.f32 %v634, 0.0
        %v639 = vadd.f32 %v635, 1e-05
        %v640 = vadd.f32 %v636, 1e-05
        %v641 = vadd.f32 %v637, 1e-05
        %v642 = vadd.f32 %v638, 1e-05
        %v643 = vrsqrt.pop %v639
        %v644 = vrsqrt.pop %v640
        %v645 = vrsqrt.pop %v641
        %v646 = vrsqrt.pop %v642
        %v647 = vmul.f32 %v461, %v643
        %v648 = vmul.f32 %v462, %v644
        %v649 = vmul.f32 %v463, %v645
        %v650 = vmul.f32 %v464, %v646
        %v651 = vmul.f32 %v603, %v647
        %v652 = vmul.f32 %v604, %v648
        %v653 = vmul.f32 %v605, %v649
        %v654 = vmul.f32 %v606, %v650
        %659 = vrot.lane.b32.xlu0 %v651, 1
        %v660 = vpop.permute.xlu0 %659
        %661 = vrot.lane.b32.xlu0 %v652, 1
        %v662 = vpop.permute.xlu0 %661
        %663 = vrot.lane.b32.xlu0 %v653, 1
        %v664 = vpop.permute.xlu0 %663
        %665 = vrot.lane.b32.xlu0 %v654, 1
        %v666 = vpop.permute.xlu0 %665
        %v671 = vsub.f32 %v461, %v660
        %v672 = vsub.f32 %v462, %v662
        %v673 = vsub.f32 %v463, %v664
        %v674 = vsub.f32 %v464, %v666
        %676 = vset.pattern.permute.xlu0 1
        %677 = vperm.xlu0 %676, %v647
        %v678 = vpop.permute.xlu0 %677
        %681 = vset.pattern.permute.xlu0 1
        %682 = vperm.xlu0 %681, %v648
        %v683 = vpop.permute.xlu0 %682
        %686 = vset.pattern.permute.xlu0 1
        %687 = vperm.xlu0 %686, %v649
        %v688 = vpop.permute.xlu0 %687
        %691 = vset.pattern.permute.xlu0 1
        %692 = vperm.xlu0 %691, %v650
        %v693 = vpop.permute.xlu0 %692
        %v695 = vmul.f32 %v572, %v678
        %v696 = vmul.f32 %v577, %v683
        %v697 = vmul.f32 %v582, %v688
        %v698 = vmul.f32 %v587, %v693
        %700 = vset.pattern.permute.xlu0 2
        %701 = vperm.xlu0 %700, %v671
        %v702 = vpop.permute.xlu0 %701
        %705 = vset.pattern.permute.xlu0 2
        %706 = vperm.xlu0 %705, %v672
        %v707 = vpop.permute.xlu0 %706
        %710 = vset.pattern.permute.xlu0 2
        %711 = vperm.xlu0 %710, %v673
        %v712 = vpop.permute.xlu0 %711
        %715 = vset.pattern.permute.xlu0 2
        %716 = vperm.xlu0 %715, %v674
        %v717 = vpop.permute.xlu0 %716
        %v719 = vadd.f32 %v695, %v702
        %v720 = vadd.f32 %v696, %v707
        %v721 = vadd.f32 %v697, %v712
        %v722 = vadd.f32 %v698, %v717
        %723 = vst.msk [vmem:[%s163 + $0x10] sm:$0xff] %vm590, %v719
        %724 = vst.msk [vmem:[%s163 + $0x28] sm:$0xff] %vm590, %v720
        %725 = vst.msk [vmem:[%s163 + $0x40] sm:$0xff] %vm590, %v721
        %726 = vst.msk [vmem:[%s163 + $0x58] sm:$0xff] %vm590, %v722
        %s727 = sand.u32 %s93, 1
        %s728 = scalar_lea.sflag [#allocation3], %s727
        %s729 = sand.u32 %s93, 1
        %s730 = smul.addr %s729, 96
        %s731 = scalar_lea.vmem [#allocation2], %s730
        // Predicated region
        $region33: #{tpu_custom_call.1} parent=31 // pred_check
          %p732 = pneg %p103
        $region34: #{tpu_custom_call.1} parent=31 // pred_check_branch
          %734 = sbr.rel (%p732) target = $region36
        $region35: #{tpu_custom_call.1} parent=31 // pred_region
          %s736 = ssub.s32 1536, 1536
          %737 = vsyncadd %s728, %s736
          %s738 = smul.addr %s17, 12
          %s739 = smul.addr %s738, 128
          %s740 = scalar_lea.hbm %s3, %s739
          %s741 = sshll.u32 %s731, 4
          %s742 = int_to_ptr.vmem [resolvable:$true] %s741
          %747 = dma.vmem_to_hbm [thread:$0]  %s742, 1536, %s740, %s728, 384, 384, 24
        $region36: #{tpu_custom_call.1} parent=31 // pred_fallthru
          _
      $region32: #{tpu_custom_call.1} parent=5 // pred_fallthru
        _
      %p748 = scmp.le.s32.totalorder 2, %s12
      // Predicated region
      $region37: #{tpu_custom_call.1} parent=5 // pred_check
        %p749 = pneg %p748
      $region38: #{tpu_custom_call.1} parent=5 // pred_check_branch
        %751 = sbr.rel (%p749) target = $region40
      $region39: #{tpu_custom_call.1} parent=5 // pred_region
        %s752 = ssub.s32 %s12, 2
        // Predicated region
        $region41: #{tpu_custom_call.1} parent=39 // pred_check
          %p753 = pneg %p109
        $region42: #{tpu_custom_call.1} parent=39 // pred_check_branch
          %755 = sbr.rel (%p753) target = $region44
        $region43: #{tpu_custom_call.1} parent=39 // pred_region
          %s756 = sand.u32 %s94, 1
          %s757 = scalar_lea.sflag [#allocation3], %s756
          %s758 = sand.u32 %s94, 1
          %s759 = smul.addr %s758, 96
          %s760 = scalar_lea.vmem [#allocation2], %s759
          %761 = dma.done %s757, 1536
        $region44: #{tpu_custom_call.1} parent=39 // pred_fallthru
          _
      $region40: #{tpu_custom_call.1} parent=5 // pred_fallthru
        _
    $region6: #{tpu_custom_call.1} parent=1 // loop_footer
      %s16 = sadd.s32 1, %s12
    $region7: #{tpu_custom_call.1} parent=1 // loop_footer_branch
      %11 = sbr.rel target = $region3
    $region8: #{tpu_custom_call.1} parent=1 // loop_exit
      _
    %762 = vsyncpa [#allocation3], 1
    %s763 = scalar_lea.sflag [#allocation3], 1
    %764 = vsyncpa %s763, 1

</llo_original>
